<compile_context>
chip_gen: v7x
topology: tpu7x:2x2x1
jax: 0.10.0
libtpu: 0.0.40
codegen_flags: <defaults>
</compile_context>

<pallas_src>
import functools

import jax
import jax.numpy as jnp
from jax.experimental import pallas as pl
from jax.experimental.pallas import tpu as pltpu


def _make_msd_kernel(probs):
    """Kernel closed over the static tuple of dropout probabilities."""
    m = float(len(probs))
    inv_m = 1.0 / m

    def kernel(x_ref, bits_ref, w_ref, b_ref, o_ref):
        x = x_ref[...]                                   # (TB, H) f32
        # Per-element total keep-scale summed over the m dropout samples.
        scale = jnp.zeros(x.shape, jnp.float32)
        for i, p in enumerate(probs):                    # static -> unrolled
            if p <= 0.0:
                # dropout with p=0 is identity; contributes 1/m everywhere.
                scale = scale + jnp.float32(inv_m)
            else:
                # integer-threshold Bernoulli: keep with prob (1 - p)
                thresh = jnp.uint32(min(int(round(p * 2.0 ** 32)), 2 ** 32 - 1))
                keep = bits_ref[i] >= thresh             # (TB, H) bool
                scale = scale + jnp.where(
                    keep,
                    jnp.float32(inv_m / (1.0 - p)),      # 1/(m*(1-p))
                    jnp.float32(0.0),
                )
        xd = x * scale                                   # one VPU multiply
        # single MXU matmul + bias (sum_i(xd_i@W + b)/m == (sum_i xd_i/m)@W + b)
        o_ref[...] = (
            jnp.dot(xd, w_ref[...], preferred_element_type=jnp.float32)
            + b_ref[...]
        )

    return kernel


@functools.partial(jax.jit, static_argnames=("probs", "block_b"))
def multi_sample_dropout(x, w, b, key, *, probs, block_b=512):
    """x: (B,H) f32, w: (H,C) f32, b: (1,C) f32, key: jax PRNG key."""
    B, H = x.shape
    C = w.shape[1]
    m = len(probs)

    # Lane-dense output: pad classes to a multiple of 128, slice afterwards.
    Cp = ((C + 127) // 128) * 128
    if Cp != C:
        w = jnp.pad(w, ((0, 0), (0, Cp - C)))
        b = jnp.pad(b, ((0, 0), (0, Cp - C)))

    # Batch tile (double-buffered stream of x / bits; W + bias stay resident).
    TB = block_b if (B % block_b == 0) else B            # TB==B ok (full dim)
    grid = (B // TB,)

    # Random bits for all m samples (uint32, one word per element per sample).
    bits = jax.random.bits(key, (m, B, H), dtype=jnp.uint32)

    # Only attach Mosaic compiler params when actually targeting TPU
    # (interpret/CPU checker ignores or rejects them).
    compiler_params = None
    if jax.default_backend() == "tpu":
        compiler_params = pltpu.CompilerParams(
            dimension_semantics=("parallel",),           # megacore on v7x
        )

    out = pl.pallas_call(
        _make_msd_kernel(tuple(probs)),
        out_shape=jax.ShapeDtypeStruct((B, Cp), jnp.float32),
        grid=grid,
        in_specs=[
            pl.BlockSpec((TB, H), lambda i: (i, 0)),        # x tile
            pl.BlockSpec((m, TB, H), lambda i: (0, i, 0)),  # bits tile
            pl.BlockSpec((H, Cp), lambda i: (0, 0)),        # W (resident)
            pl.BlockSpec((1, Cp), lambda i: (0, 0)),        # bias (resident)
        ],
        out_specs=pl.BlockSpec((TB, Cp), lambda i: (i, 0)),
        compiler_params=compiler_params,
    )(x, bits, w, b)

    return out[:, :C]


if __name__ == "__main__":
    # MultiSampleDropout(classifier=Linear(H, C), size=4, start_prob=0.1, increment=0.05)
    size = 4
    start_prob = 0.1
    increment = 0.05
    probs = tuple(start_prob + increment * i for i in range(size))

    B, H, C = 8, 128, 16   # small: batch=8, hidden=128, classes=16

    key = jax.random.PRNGKey(0)
    kx, kw, kb, kd = jax.random.split(key, 4)
    x = jax.random.normal(kx, (B, H), dtype=jnp.float32)
    w = jax.random.normal(kw, (H, C), dtype=jnp.float32) * 0.05   # Linear weight
    b = jax.random.normal(kb, (1, C), dtype=jnp.float32) * 0.01   # Linear bias

    # 1) zero-prob sanity check: module reduces to the plain classifier.
    out0 = multi_sample_dropout(x, w, b, kd, probs=(0.0,) * size)
    ref0 = x @ w + b
    assert out0.shape == (B, C)
    assert jnp.allclose(out0, ref0, atol=2e-2, rtol=2e-2), "zero-prob check failed"

    # 2) exact-mask reference: rebuild the same keep-scale field from the same
    #    random bits the kernel consumes and compare against the kernel output.
    m = len(probs)
    bits = jax.random.bits(kd, (m, B, H), dtype=jnp.uint32)
    scale = jnp.zeros((B, H), jnp.float32)
    for i, p in enumerate(probs):
        thresh = jnp.uint32(min(int(round(p * 2.0 ** 32)), 2 ** 32 - 1))
        keep = bits[i] >= thresh
        scale = scale + jnp.where(keep, 1.0 / (m * (1.0 - p)), 0.0)
    ref1 = (x * scale) @ w + b

    out1 = multi_sample_dropout(x, w, b, kd, probs=probs)
    jax.block_until_ready(out1)
    assert out1.shape == (B, C) and out1.dtype == jnp.float32
    assert jnp.allclose(out1, ref1, atol=2e-2, rtol=2e-2), "dropout-path check failed"

    print("KERNEL_OK")
</pallas_src>

<mosaic_0001>
module attributes {stable_mosaic.version = 11 : i64} {
  func.func @kernel(%arg0: i32, %arg1: memref<8x128xf32, #tpu.memory_space<vmem>>, %arg2: memref<4x8x128xi32, #tpu.memory_space<vmem>>, %arg3: memref<128x128xf32, #tpu.memory_space<vmem>>, %arg4: memref<1x128xf32, #tpu.memory_space<vmem>>, %arg5: memref<8x128xf32, #tpu.memory_space<vmem>>) attributes {dimension_semantics = [#tpu.dimension_semantics<arbitrary>], iteration_bounds = array<i64: 1>, scalar_prefetch = 0 : i64, scratch_operands = 0 : i64, tpu.core_type = #tpu.core_type<tc>, window_params = [{transform_indices = @transform_0, window_bounds = array<i64: 8, 128>}, {transform_indices = @transform_1, window_bounds = array<i64: 4, 8, 128>}, {pipeline_mode = #tpu.pipeline_mode<synchronous>, transform_indices = @transform_2, window_bounds = array<i64: 128, 128>}, {pipeline_mode = #tpu.pipeline_mode<synchronous>, transform_indices = @transform_3, window_bounds = array<i64: 1, 128>}, {transform_indices = @transform_4, window_bounds = array<i64: 8, 128>}]} {
    %c0 = arith.constant 0 : index
    %c0_0 = arith.constant 0 : index
    %0 = vector.load %arg1[%c0, %c0_0] : memref<8x128xf32, #tpu.memory_space<vmem>>, vector<8x128xf32>
    %cst = arith.constant 0.000000e+00 : f32
    %1 = vector.broadcast %cst : f32 to vector<8x128xf32>
    %cst_1 = arith.constant 2.500000e-01 : f32
    %2 = vector.broadcast %cst_1 : f32 to vector<8x128xf32>
    %3 = arith.addf %1, %2 : vector<8x128xf32>
    %cst_2 = arith.constant 2.500000e-01 : f32
    %4 = vector.broadcast %cst_2 : f32 to vector<8x128xf32>
    %5 = arith.addf %3, %4 : vector<8x128xf32>
    %cst_3 = arith.constant 2.500000e-01 : f32
    %6 = vector.broadcast %cst_3 : f32 to vector<8x128xf32>
    %7 = arith.addf %5, %6 : vector<8x128xf32>
    %cst_4 = arith.constant 2.500000e-01 : f32
    %8 = vector.broadcast %cst_4 : f32 to vector<8x128xf32>
    %9 = arith.addf %7, %8 : vector<8x128xf32>
    %10 = arith.mulf %0, %9 : vector<8x128xf32>
    %c0_5 = arith.constant 0 : index
    %c0_6 = arith.constant 0 : index
    %11 = vector.load %arg3[%c0_5, %c0_6] : memref<128x128xf32, #tpu.memory_space<vmem>>, vector<128x128xf32>
    %cst_7 = arith.constant dense<0.000000e+00> : vector<8x128xf32>
    %12 = tpu.matmul %10, %11, %cst_7 {dimension_numbers = #tpu.dot_dimension_numbers<[1], [0], [0], [1], [0, 0, 1, 1], [], []>} : vector<8x128xf32>, vector<128x128xf32>, vector<8x128xf32> -> vector<8x128xf32>
    %c0_8 = arith.constant 0 : index
    %c0_9 = arith.constant 0 : index
    %13 = vector.load %arg4[%c0_8, %c0_9] : memref<1x128xf32, #tpu.memory_space<vmem>>, vector<1x128xf32>
    %14 = vector.broadcast %13 : vector<1x128xf32> to vector<8x128xf32>
    %15 = arith.addf %12, %14 : vector<8x128xf32>
    %c0_10 = arith.constant 0 : index
    %c0_11 = arith.constant 0 : index
    %16 = vector.load %arg5[%c0_10, %c0_11] : memref<8x128xf32, #tpu.memory_space<vmem>>, vector<8x128xf32>
    tpu.vector_store %arg5[%c0_10, %c0_11], %15 {strides = array<i32>} : memref<8x128xf32, #tpu.memory_space<vmem>>, vector<8x128xf32>,
    return
  }
  func.func @transform_0(%arg0: i32) -> (i32, i32) {
    %c0_i32 = arith.constant 0 : i32
    %c0_i32_0 = arith.constant 0 : i32
    return %arg0, %c0_i32 : i32, i32
  }
  func.func @transform_1(%arg0: i32) -> (i32, i32, i32) {
    %c0_i32 = arith.constant 0 : i32
    %c0_i32_0 = arith.constant 0 : i32
    %c0_i32_1 = arith.constant 0 : i32
    return %c0_i32, %arg0, %c0_i32_0 : i32, i32, i32
  }
  func.func @transform_2(%arg0: i32) -> (i32, i32) {
    %c0_i32 = arith.constant 0 : i32
    %c0_i32_0 = arith.constant 0 : i32
    %c0_i32_1 = arith.constant 0 : i32
    return %c0_i32, %c0_i32_0 : i32, i32
  }
  func.func @transform_3(%arg0: i32) -> (i32, i32) {
    %c0_i32 = arith.constant 0 : i32
    %c0_i32_0 = arith.constant 0 : i32
    %c0_i32_1 = arith.constant 0 : i32
    return %c0_i32, %c0_i32_0 : i32, i32
  }
  func.func @transform_4(%arg0: i32) -> (i32, i32) {
    %c0_i32 = arith.constant 0 : i32
    %c0_i32_0 = arith.constant 0 : i32
    return %arg0, %c0_i32 : i32, i32
  }
}

</mosaic_0001>

<llo_original>
// kernel: multi_sample_dropout.1
$region0: #{multi_sample_dropout.1}
  #allocation0 [shape = 'u32[]', space=smem, size = 0x4, offset = 0x4, fixed_abs, tag = 'smem constant byte address 0x4 - core index']
  #allocation1 [shape = 'u32[144,128]{1,0:T(1,128)}', space=vmem, size = 0x12000, scoped, tag = 'internal scratch']
  %s0 = inlined_call_operand.vmem [shape: f32[8,128], index: 0, kind: input, shape index: {}]
  %s1 = inlined_call_operand.vmem [shape: u32[4,8,128], index: 1, kind: input, shape index: {}]
  %s2 = inlined_call_operand.vmem [shape: f32[128,128], index: 2, kind: input, shape index: {}]
  %s3 = inlined_call_operand.vmem [shape: f32[1,128], index: 3, kind: input, shape index: {}]
  %s4 = inlined_call_operand.hbm [shape: f32[8,128], index: 4, kind: output, shape index: {}]
  %s5 = sld [smem:[#allocation0]]
  $region26: #{multi_sample_dropout.1} parent=0
    _
  %s7 = ssub.s32 1, %s5
  %s8 = scalar_select 0, %s7, %s5
  $region1: #{multi_sample_dropout.1} parent=0
    #allocation2 [shape = 'u8[4096]{0}', space=vmem, size = 0x1000, scoped, tag = 'output window, operand 0, single buffered']
    #allocation3 [shape = 's32[1]{0}', space=sflag, size = 0x4, scoped, tag = 'scoped memory for multi_sample_dropout.1']
    %9 = vsyncpa [#allocation3], 0
    // Predicated region
    $region2: #{multi_sample_dropout.1} parent=1 // pred_check
      _
    $region3: #{multi_sample_dropout.1} parent=1 // pred_check_branch
      %11 = sbr.rel (0) target = $region5
    $region4: #{multi_sample_dropout.1} parent=1 // pred_region
      _
    $region5: #{multi_sample_dropout.1} parent=1 // pred_fallthru
      _
    // Predicated region
    $region6: #{multi_sample_dropout.1} parent=1 // pred_check
      _
    $region7: #{multi_sample_dropout.1} parent=1 // pred_check_branch
      %13 = sbr.rel (0) target = $region9
    $region8: #{multi_sample_dropout.1} parent=1 // pred_region
      _
    $region9: #{multi_sample_dropout.1} parent=1 // pred_fallthru
      _
    // Predicated region
    $region10: #{multi_sample_dropout.1} parent=1 // pred_check
      _
    $region11: #{multi_sample_dropout.1} parent=1 // pred_check_branch
      %15 = sbr.rel (0) target = $region13
    $region12: #{multi_sample_dropout.1} parent=1 // pred_region
      _
    $region13: #{multi_sample_dropout.1} parent=1 // pred_fallthru
      _
    // Predicated region
    $region14: #{multi_sample_dropout.1} parent=1 // pred_check
      _
    $region15: #{multi_sample_dropout.1} parent=1 // pred_check_branch
      %17 = sbr.rel (0) target = $region17
    $region16: #{multi_sample_dropout.1} parent=1 // pred_region
      _
    $region17: #{multi_sample_dropout.1} parent=1 // pred_fallthru
      _
    %v18 = vld [vmem:[%s0] sm:$0xff]
    %v19 = vld [vmem:[%s2] sm:$0xff]
    %v20 = vld [vmem:[%s2 + $0x8] sm:$0xff]
    %v21 = vld [vmem:[%s2 + $0x10] sm:$0xff]
    %v22 = vld [vmem:[%s2 + $0x18] sm:$0xff]
    %v23 = vld [vmem:[%s2 + $0x20] sm:$0xff]
    %v24 = vld [vmem:[%s2 + $0x28] sm:$0xff]
    %v25 = vld [vmem:[%s2 + $0x30] sm:$0xff]
    %v26 = vld [vmem:[%s2 + $0x38] sm:$0xff]
    %v27 = vld [vmem:[%s2 + $0x40] sm:$0xff]
    %v28 = vld [vmem:[%s2 + $0x48] sm:$0xff]
    %v29 = vld [vmem:[%s2 + $0x50] sm:$0xff]
    %v30 = vld [vmem:[%s2 + $0x58] sm:$0xff]
    %v31 = vld [vmem:[%s2 + $0x60] sm:$0xff]
    %v32 = vld [vmem:[%s2 + $0x68] sm:$0xff]
    %v33 = vld [vmem:[%s2 + $0x70] sm:$0xff]
    %v34 = vld [vmem:[%s2 + $0x78] sm:$0xff]
    %v35 = vld [vmem:[%s3] sm:$0x1]
    %v37 = vlaneseq
    %v38 = vshrl.u32 %v37, 7
    %v39 = vsub.s32 0, %v38
    %v40 = vrot.slane %v35, %v39
    %42 = vmatprep.subr.mxu0 0.0
    %43 = vmatpush1.msra.mxu0 %v19
    %44 = vmatprep.subr.mxu0 0.0
    %45 = vmatpush1.msra.mxu0 %v20
    %46 = vmatprep.subr.mxu0 0.0
    %47 = vmatpush1.msra.mxu0 %v21
    %48 = vmatprep.subr.mxu0 0.0
    %49 = vmatpush1.msra.mxu0 %v22
    %50 = vmatprep.subr.mxu0 0.0
    %51 = vmatpush1.msra.mxu0 %v23
    %52 = vmatprep.subr.mxu0 0.0
    %53 = vmatpush1.msra.mxu0 %v24
    %54 = vmatprep.subr.mxu0 0.0
    %55 = vmatpush1.msra.mxu0 %v25
    %56 = vmatprep.subr.mxu0 0.0
    %57 = vmatpush1.msra.mxu0 %v26
    %58 = vmatprep.subr.mxu0 0.0
    %59 = vmatpush1.msra.mxu0 %v27
    %60 = vmatprep.subr.mxu0 0.0
    %61 = vmatpush1.msra.mxu0 %v28
    %62 = vmatprep.subr.mxu0 0.0
    %63 = vmatpush1.msra.mxu0 %v29
    %64 = vmatprep.subr.mxu0 0.0
    %65 = vmatpush1.msra.mxu0 %v30
    %66 = vmatprep.subr.mxu0 0.0
    %67 = vmatpush1.msra.mxu0 %v31
    %68 = vmatprep.subr.mxu0 0.0
    %69 = vmatpush1.msra.mxu0 %v32
    %70 = vmatprep.subr.mxu0 0.0
    %71 = vmatpush1.msra.mxu0 %v33
    %72 = vmatprep.subr.mxu0 0.0
    %73 = vmatpush1.msra.mxu0 %v34
    %74 = vmatprep.subr.mxu0 0.0
    %75 = vmatpush1.msra.mxu0 0.0
    %76 = vmatprep.subr.mxu0 0.0
    %77 = vmatpush1.msra.mxu0 0.0
    %78 = vmatprep.subr.mxu0 0.0
    %79 = vmatpush1.msra.mxu0 0.0
    %80 = vmatprep.subr.mxu0 0.0
    %81 = vmatpush1.msra.mxu0 0.0
    %82 = vmatprep.subr.mxu0 0.0
    %83 = vmatpush1.msra.mxu0 0.0
    %84 = vmatprep.subr.mxu0 0.0
    %85 = vmatpush1.msra.mxu0 0.0
    %86 = vmatprep.subr.mxu0 0.0
    %87 = vmatpush1.msra.mxu0 0.0
    %88 = vmatprep.subr.mxu0 0.0
    %89 = vmatpush1.msra.mxu0 0.0
    %90 = vmatprep.subr.mxu0 0.0
    %91 = vmatpush1.msra.mxu0 0.0
    %92 = vmatprep.subr.mxu0 0.0
    %93 = vmatpush1.msra.mxu0 0.0
    %94 = vmatprep.subr.mxu0 0.0
    %95 = vmatpush1.msra.mxu0 0.0
    %96 = vmatprep.subr.mxu0 0.0
    %97 = vmatpush1.msra.mxu0 0.0
    %98 = vmatprep.subr.mxu0 0.0
    %99 = vmatpush1.msra.mxu0 0.0
    %100 = vmatprep.subr.mxu0 0.0
    %101 = vmatpush1.msra.mxu0 0.0
    %102 = vmatprep.subr.mxu0 0.0
    %103 = vmatpush1.msra.mxu0 0.0
    %104 = vmatprep.subr.mxu0 0.0
    %105 = vmatpush1.msra.mxu0 0.0
    %106 = vmatprep.mubr.f32.mxu0 0.0
    %107 = vmatmul.mubr.f32.gmra.mrb[0].mxu0 %v18
    %v108 = vpop.f32.mrb[0].mxu0
    %v109 = vadd.f32 %v40, %v108
    %v110 = vpop.f32.mrb[0].mxu0
    %111 = vdwg.mxu0
    %112 = vst [vmem:[#allocation2] sm:$0xff] %v109
    // Predicated region
    $region18: #{multi_sample_dropout.1} parent=1 // pred_check
      _
    $region19: #{multi_sample_dropout.1} parent=1 // pred_check_branch
      %114 = sbr.rel (0) target = $region21
    $region20: #{multi_sample_dropout.1} parent=1 // pred_region
      %s116 = ssub.s32 128, 128
      %117 = vsyncadd [#allocation3], %s116
      %s119 = sshll.u32 [#allocation2], 4
      %s120 = int_to_ptr.vmem [resolvable:$true] %s119
      %122 = dma.vmem_to_hbm [thread:$0]  %s120, 128, %s4, [#allocation3]
    $region21: #{multi_sample_dropout.1} parent=1 // pred_fallthru
      _
    // Predicated region
    $region22: #{multi_sample_dropout.1} parent=1 // pred_check
      _
    $region23: #{multi_sample_dropout.1} parent=1 // pred_check_branch
      %124 = sbr.rel (0) target = $region25
    $region24: #{multi_sample_dropout.1} parent=1 // pred_region
      %125 = dma.done [#allocation3], 128
    $region25: #{multi_sample_dropout.1} parent=1 // pred_fallthru
      _
    %126 = vsyncpa [#allocation3], 1

</llo_original>
